<compile_context>
chip_gen: v6e
topology: v6e:2x2x1
jax: 0.10.0
libtpu: 0.0.40
codegen_flags: <defaults>
</compile_context>

<pallas_src>
import functools

import jax
import jax.numpy as jnp
from jax.experimental import pallas as pl
from jax.experimental.pallas import tpu as pltpu

INPUT_DIMS = 4
OUTPUT_DIMS = 2
HIDDEN_SIZE = 32
NUM_HIDDEN_LAYERS = 2
NUM_LAYERS = NUM_HIDDEN_LAYERS + 2  # input + 2 hidden + final = 4

IN_PAD = 8    # INPUT_DIMS padded to one sublane tile
OUT_PAD = 8   # OUTPUT_DIMS padded to one sublane tile


def _mlp_kernel(x_ref, w0_ref, wh_ref, wf_ref, b_ref, o_ref):
    """Whole forward pass for one batch tile (batch on lanes).

    x_ref : (IN_PAD, TB)                      rows >= INPUT_DIMS are zero
    w0_ref: (HIDDEN_SIZE, IN_PAD)             layer-0 weights (out, in_pad)
    wh_ref: (NUM_HIDDEN_LAYERS, H, H)         hidden-layer weights (out, in)
    wf_ref: (OUT_PAD, HIDDEN_SIZE)            final weights, rows >= 2 are zero
    b_ref : (NUM_LAYERS, HIDDEN_SIZE, 1)      zero-padded biases
    o_ref : (OUT_PAD, TB)                     padded logits
    """
    h = jnp.dot(w0_ref[...], x_ref[...], preferred_element_type=jnp.float32)
    h = jnp.maximum(h + b_ref[0], 0.0)
    for l in range(NUM_HIDDEN_LAYERS):  # statically unrolled
        h = jnp.dot(wh_ref[l], h, preferred_element_type=jnp.float32)
        h = jnp.maximum(h + b_ref[1 + l], 0.0)
    y = jnp.dot(wf_ref[...], h, preferred_element_type=jnp.float32)
    b_last = b_ref[NUM_LAYERS - 1]
    o_ref[...] = (y + b_last[:OUT_PAD, :]).astype(o_ref.dtype)


@functools.partial(jax.jit, static_argnames=("block_b",))
def network_forward(x, w0, wh, wf, b_stack, block_b=None):
    """x: (B, INPUT_DIMS) float32 -> (B, OUTPUT_DIMS) float32."""
    batch = x.shape[0]

    if block_b is None:
        b_lanes = pl.cdiv(max(batch, 1), 128) * 128
        if b_lanes >= 256:
            # >= 2 balanced blocks (v7x megacore), each at most 4096 wide.
            block_b = min(4096, pl.cdiv(b_lanes // 2, 128) * 128)
        else:
            block_b = 128
    num_blocks = pl.cdiv(batch, block_b)
    b_pad = num_blocks * block_b

    # Feature-major, zero-padded activation slab: single pad of x.T.
    x_fm = jnp.pad(x.astype(jnp.float32).T,
                   ((0, IN_PAD - INPUT_DIMS), (0, b_pad - batch)))

    cost = pl.CostEstimate(
        flops=2 * b_pad * (IN_PAD * HIDDEN_SIZE
                           + NUM_HIDDEN_LAYERS * HIDDEN_SIZE * HIDDEN_SIZE
                           + OUT_PAD * HIDDEN_SIZE),
        transcendentals=0,
        bytes_accessed=4 * (IN_PAD * b_pad + OUT_PAD * b_pad
                            + w0.size + wh.size + wf.size + b_stack.size),
    )

    out_fm = pl.pallas_call(
        _mlp_kernel,
        out_shape=jax.ShapeDtypeStruct((OUT_PAD, b_pad), jnp.float32),
        grid=(num_blocks,),
        in_specs=[
            # activations: one lane-dense batch tile per grid step
            pl.BlockSpec((IN_PAD, block_b), lambda i: (0, i)),
            # parameters: full arrays, constant index -> resident in VMEM
            pl.BlockSpec((HIDDEN_SIZE, IN_PAD), lambda i: (0, 0)),
            pl.BlockSpec((NUM_HIDDEN_LAYERS, HIDDEN_SIZE, HIDDEN_SIZE),
                         lambda i: (0, 0, 0)),
            pl.BlockSpec((OUT_PAD, HIDDEN_SIZE), lambda i: (0, 0)),
            pl.BlockSpec((NUM_LAYERS, HIDDEN_SIZE, 1), lambda i: (0, 0, 0)),
        ],
        out_specs=pl.BlockSpec((OUT_PAD, block_b), lambda i: (0, i)),
        compiler_params=pltpu.CompilerParams(
            dimension_semantics=("parallel",)),  # megacore split on v7x
        cost_estimate=cost,
    )(x_fm, w0, wh, wf, b_stack)

    return out_fm[:OUTPUT_DIMS, :batch].T


def init_params(key):
    """Deterministic init matching nn.Linear shapes (W stored as (in, out))."""
    dims = [INPUT_DIMS] + [HIDDEN_SIZE] * (1 + NUM_HIDDEN_LAYERS) + [OUTPUT_DIMS]
    params = []
    for i, (fan_in, fan_out) in enumerate(zip(dims[:-1], dims[1:])):
        kw, kb, key = jax.random.split(jax.random.fold_in(key, i), 3)
        bound = 1.0 / jnp.sqrt(float(fan_in))
        w = jax.random.uniform(kw, (fan_in, fan_out), jnp.float32, -bound, bound)
        b = jax.random.uniform(kb, (1, fan_out), jnp.float32, -bound, bound)
        params += [w, b]
    return params


def pack_params(params):
    """Pack the 8 (W, b) arrays into the kernel layout (done ONCE per policy):
      w0      (HIDDEN_SIZE, IN_PAD)   layer-0 weights (out, in), cols >=4 zero
      wh      (L_hidden, H, H)        hidden weights (out, in)
      wf      (OUT_PAD, HIDDEN_SIZE)  final weights, rows >=2 zero
      b_stack (NUM_LAYERS, H, 1)      biases, zero-padded
    Padded regions MUST stay exactly zero for correctness."""
    ws, bs = params[0::2], params[1::2]

    w0 = jnp.zeros((HIDDEN_SIZE, IN_PAD), jnp.float32)
    w0 = w0.at[:, :INPUT_DIMS].set(ws[0].T.astype(jnp.float32))

    wh = jnp.stack([w.T.astype(jnp.float32)
                    for w in ws[1:1 + NUM_HIDDEN_LAYERS]])

    wf = jnp.zeros((OUT_PAD, HIDDEN_SIZE), jnp.float32)
    wf = wf.at[:OUTPUT_DIMS, :].set(ws[-1].T.astype(jnp.float32))

    b_stack = jnp.zeros((NUM_LAYERS, HIDDEN_SIZE, 1), jnp.float32)
    for l, b in enumerate(bs):
        b_stack = b_stack.at[l, :b.size, 0].set(
            b.reshape(-1).astype(jnp.float32))
    return w0, wh, wf, b_stack


def reference_forward(x, params):
    h = x
    for i in range(0, len(params) - 2, 2):
        h = jnp.maximum(h @ params[i] + params[i + 1], 0.0)
    return h @ params[-2] + params[-1]


if __name__ == "__main__":
    key = jax.random.PRNGKey(0)
    key_x, key_p = jax.random.split(key)

    params = init_params(key_p)
    w0, wh, wf, b_stack = pack_params(params)   # packed once, reused per call

    # Small check (original module scale): batch = 8.
    batch = 8
    x = jax.random.normal(key_x, (batch, INPUT_DIMS), dtype=jnp.float32)
    out = jax.block_until_ready(network_forward(x, w0, wh, wf, b_stack))
    ref = reference_forward(x, params)
    assert out.shape == (batch, OUTPUT_DIMS)
    assert jnp.allclose(out, ref, atol=1e-5, rtol=1e-5)

    # Larger, non-aligned batch: exercises padding + multi-block parallel grid.
    batch2 = 300
    x2 = jax.random.normal(jax.random.fold_in(key_x, 1), (batch2, INPUT_DIMS),
                           dtype=jnp.float32)
    out2 = jax.block_until_ready(network_forward(x2, w0, wh, wf, b_stack))
    ref2 = reference_forward(x2, params)
    assert out2.shape == (batch2, OUTPUT_DIMS)
    assert jnp.allclose(out2, ref2, atol=1e-5, rtol=1e-5)

    print("KERNEL_OK")
</pallas_src>

<mosaic_0001>
module attributes {stable_mosaic.version = 11 : i64} {
  func.func @_mlp_kernel(%arg0: i32, %arg1: memref<8x128xf32, #tpu.memory_space<vmem>>, %arg2: memref<32x8xf32, #tpu.memory_space<vmem>>, %arg3: memref<2x32x32xf32, #tpu.memory_space<vmem>>, %arg4: memref<8x32xf32, #tpu.memory_space<vmem>>, %arg5: memref<4x32x1xf32, #tpu.memory_space<vmem>>, %arg6: memref<8x128xf32, #tpu.memory_space<vmem>>) attributes {dimension_semantics = [#tpu.dimension_semantics<parallel>], iteration_bounds = array<i64: 1>, scalar_prefetch = 0 : i64, scratch_operands = 0 : i64, tpu.core_type = #tpu.core_type<tc>, window_params = [{transform_indices = @transform_0, window_bounds = array<i64: 8, 128>}, {pipeline_mode = #tpu.pipeline_mode<synchronous>, transform_indices = @transform_1, window_bounds = array<i64: 32, 8>}, {pipeline_mode = #tpu.pipeline_mode<synchronous>, transform_indices = @transform_2, window_bounds = array<i64: 2, 32, 32>}, {pipeline_mode = #tpu.pipeline_mode<synchronous>, transform_indices = @transform_3, window_bounds = array<i64: 8, 32>}, {pipeline_mode = #tpu.pipeline_mode<synchronous>, transform_indices = @transform_4, window_bounds = array<i64: 4, 32, 1>}, {transform_indices = @transform_5, window_bounds = array<i64: 8, 128>}]} {
    %c0 = arith.constant 0 : index
    %c0_0 = arith.constant 0 : index
    %0 = vector.load %arg2[%c0, %c0_0] : memref<32x8xf32, #tpu.memory_space<vmem>>, vector<32x8xf32>
    %c0_1 = arith.constant 0 : index
    %c0_2 = arith.constant 0 : index
    %1 = vector.load %arg1[%c0_1, %c0_2] : memref<8x128xf32, #tpu.memory_space<vmem>>, vector<8x128xf32>
    %cst = arith.constant dense<0.000000e+00> : vector<32x128xf32>
    %2 = tpu.matmul %0, %1, %cst {dimension_numbers = #tpu.dot_dimension_numbers<[1], [0], [0], [1], [0, 0, 1, 1], [], []>} : vector<32x8xf32>, vector<8x128xf32>, vector<32x128xf32> -> vector<32x128xf32>
    %c0_3 = arith.constant 0 : index
    %c0_4 = arith.constant 0 : index
    %c0_5 = arith.constant 0 : index
    %3 = vector.load %arg5[%c0_3, %c0_4, %c0_5] : memref<4x32x1xf32, #tpu.memory_space<vmem>>, vector<1x32x1xf32>
    %4 = vector.shape_cast %3 : vector<1x32x1xf32> to vector<32x1xf32>
    %5 = vector.broadcast %4 : vector<32x1xf32> to vector<32x128xf32>
    %6 = arith.addf %2, %5 : vector<32x128xf32>
    %cst_6 = arith.constant 0.000000e+00 : f32
    %7 = vector.broadcast %cst_6 : f32 to vector<32x128xf32>
    %8 = arith.maximumf %6, %7 : vector<32x128xf32>
    %c0_7 = arith.constant 0 : index
    %c0_8 = arith.constant 0 : index
    %c0_9 = arith.constant 0 : index
    %9 = vector.load %arg3[%c0_7, %c0_8, %c0_9] : memref<2x32x32xf32, #tpu.memory_space<vmem>>, vector<1x32x32xf32>
    %10 = vector.shape_cast %9 : vector<1x32x32xf32> to vector<32x32xf32>
    %cst_10 = arith.constant dense<0.000000e+00> : vector<32x128xf32>
    %11 = tpu.matmul %10, %8, %cst_10 {dimension_numbers = #tpu.dot_dimension_numbers<[1], [0], [0], [1], [0, 0, 1, 1], [], []>} : vector<32x32xf32>, vector<32x128xf32>, vector<32x128xf32> -> vector<32x128xf32>
    %c1 = arith.constant 1 : index
    %c0_11 = arith.constant 0 : index
    %c0_12 = arith.constant 0 : index
    %12 = vector.load %arg5[%c1, %c0_11, %c0_12] : memref<4x32x1xf32, #tpu.memory_space<vmem>>, vector<1x32x1xf32>
    %13 = vector.shape_cast %12 : vector<1x32x1xf32> to vector<32x1xf32>
    %14 = vector.broadcast %13 : vector<32x1xf32> to vector<32x128xf32>
    %15 = arith.addf %11, %14 : vector<32x128xf32>
    %cst_13 = arith.constant 0.000000e+00 : f32
    %16 = vector.broadcast %cst_13 : f32 to vector<32x128xf32>
    %17 = arith.maximumf %15, %16 : vector<32x128xf32>
    %c1_14 = arith.constant 1 : index
    %c0_15 = arith.constant 0 : index
    %c0_16 = arith.constant 0 : index
    %18 = vector.load %arg3[%c1_14, %c0_15, %c0_16] : memref<2x32x32xf32, #tpu.memory_space<vmem>>, vector<1x32x32xf32>
    %19 = vector.shape_cast %18 : vector<1x32x32xf32> to vector<32x32xf32>
    %cst_17 = arith.constant dense<0.000000e+00> : vector<32x128xf32>
    %20 = tpu.matmul %19, %17, %cst_17 {dimension_numbers = #tpu.dot_dimension_numbers<[1], [0], [0], [1], [0, 0, 1, 1], [], []>} : vector<32x32xf32>, vector<32x128xf32>, vector<32x128xf32> -> vector<32x128xf32>
    %c2 = arith.constant 2 : index
    %c0_18 = arith.constant 0 : index
    %c0_19 = arith.constant 0 : index
    %21 = vector.load %arg5[%c2, %c0_18, %c0_19] : memref<4x32x1xf32, #tpu.memory_space<vmem>>, vector<1x32x1xf32>
    %22 = vector.shape_cast %21 : vector<1x32x1xf32> to vector<32x1xf32>
    %23 = vector.broadcast %22 : vector<32x1xf32> to vector<32x128xf32>
    %24 = arith.addf %20, %23 : vector<32x128xf32>
    %cst_20 = arith.constant 0.000000e+00 : f32
    %25 = vector.broadcast %cst_20 : f32 to vector<32x128xf32>
    %26 = arith.maximumf %24, %25 : vector<32x128xf32>
    %c0_21 = arith.constant 0 : index
    %c0_22 = arith.constant 0 : index
    %27 = vector.load %arg4[%c0_21, %c0_22] : memref<8x32xf32, #tpu.memory_space<vmem>>, vector<8x32xf32>
    %cst_23 = arith.constant dense<0.000000e+00> : vector<8x128xf32>
    %28 = tpu.matmul %27, %26, %cst_23 {dimension_numbers = #tpu.dot_dimension_numbers<[1], [0], [0], [1], [0, 0, 1, 1], [], []>} : vector<8x32xf32>, vector<32x128xf32>, vector<8x128xf32> -> vector<8x128xf32>
    %c3 = arith.constant 3 : index
    %c0_24 = arith.constant 0 : index
    %c0_25 = arith.constant 0 : index
    %29 = vector.load %arg5[%c3, %c0_24, %c0_25] : memref<4x32x1xf32, #tpu.memory_space<vmem>>, vector<1x32x1xf32>
    %30 = vector.shape_cast %29 : vector<1x32x1xf32> to vector<32x1xf32>
    %31 = vector.extract_strided_slice %30 {offsets = [0, 0], sizes = [8, 1], strides = [1, 1]} : vector<32x1xf32> to vector<8x1xf32>
    %32 = vector.broadcast %31 : vector<8x1xf32> to vector<8x128xf32>
    %33 = arith.addf %28, %32 : vector<8x128xf32>
    %c0_26 = arith.constant 0 : index
    %c0_27 = arith.constant 0 : index
    %34 = vector.load %arg6[%c0_26, %c0_27] : memref<8x128xf32, #tpu.memory_space<vmem>>, vector<8x128xf32>
    tpu.vector_store %arg6[%c0_26, %c0_27], %33 {strides = array<i32>} : memref<8x128xf32, #tpu.memory_space<vmem>>, vector<8x128xf32>,
    return
  }
  func.func @transform_0(%arg0: i32) -> (i32, i32) {
    %c0_i32 = arith.constant 0 : i32
    %c0_i32_0 = arith.constant 0 : i32
    return %c0_i32, %arg0 : i32, i32
  }
  func.func @transform_1(%arg0: i32) -> (i32, i32) {
    %c0_i32 = arith.constant 0 : i32
    %c0_i32_0 = arith.constant 0 : i32
    %c0_i32_1 = arith.constant 0 : i32
    return %c0_i32, %c0_i32_0 : i32, i32
  }
  func.func @transform_2(%arg0: i32) -> (i32, i32, i32) {
    %c0_i32 = arith.constant 0 : i32
    %c0_i32_0 = arith.constant 0 : i32
    %c0_i32_1 = arith.constant 0 : i32
    %c0_i32_2 = arith.constant 0 : i32
    return %c0_i32, %c0_i32_0, %c0_i32_1 : i32, i32, i32
  }
  func.func @transform_3(%arg0: i32) -> (i32, i32) {
    %c0_i32 = arith.constant 0 : i32
    %c0_i32_0 = arith.constant 0 : i32
    %c0_i32_1 = arith.constant 0 : i32
    return %c0_i32, %c0_i32_0 : i32, i32
  }
  func.func @transform_4(%arg0: i32) -> (i32, i32, i32) {
    %c0_i32 = arith.constant 0 : i32
    %c0_i32_0 = arith.constant 0 : i32
    %c0_i32_1 = arith.constant 0 : i32
    %c0_i32_2 = arith.constant 0 : i32
    return %c0_i32, %c0_i32_0, %c0_i32_1 : i32, i32, i32
  }
  func.func @transform_5(%arg0: i32) -> (i32, i32) {
    %c0_i32 = arith.constant 0 : i32
    %c0_i32_0 = arith.constant 0 : i32
    return %c0_i32, %arg0 : i32, i32
  }
}

</mosaic_0001>

<llo_original>
// kernel: network_forward.1
$region0: #{network_forward.1}
  #allocation0 [shape = 'u32[]', space=smem, size = 0x4, offset = 0x4, fixed_abs, tag = 'smem constant byte address 0x4 - core index']
  #allocation1 [shape = 'u32[144,128]{1,0:T(1,128)}', space=vmem, size = 0x12000, scoped, tag = 'internal scratch']
  %s0 = inlined_call_operand.vmem [shape: f32[8,128], index: 0, kind: input, shape index: {}]
  %s1 = inlined_call_operand.vmem [shape: f32[32,8], index: 1, kind: input, shape index: {}]
  %s2 = inlined_call_operand.vmem [shape: f32[2,32,32], index: 2, kind: input, shape index: {}]
  %s3 = inlined_call_operand.vmem [shape: f32[8,32], index: 3, kind: input, shape index: {}]
  %s4 = inlined_call_operand.vmem [shape: f32[4,32,1], index: 4, kind: input, shape index: {}]
  %s5 = inlined_call_operand.vmem [shape: f32[8,128], index: 5, kind: output, shape index: {}]
  %s6 = sld [smem:[#allocation0]]
  $region30: #{network_forward.1} parent=0
    _
  %s8 = ssub.s32 1, %s6
  %s9 = scalar_select 0, %s8, %s6
  // Predicated region
  $region2: #{network_forward.1} parent=0 // pred_check
    _
  $region3: #{network_forward.1} parent=0 // pred_check_branch
    %11 = sbr.rel (0) target = $region5
  $region4: #{network_forward.1} parent=0 // pred_region
    _
  $region5: #{network_forward.1} parent=0 // pred_fallthru
    _
  // Predicated region
  $region6: #{network_forward.1} parent=0 // pred_check
    _
  $region7: #{network_forward.1} parent=0 // pred_check_branch
    %13 = sbr.rel (0) target = $region9
  $region8: #{network_forward.1} parent=0 // pred_region
    _
  $region9: #{network_forward.1} parent=0 // pred_fallthru
    _
  // Predicated region
  $region10: #{network_forward.1} parent=0 // pred_check
    _
  $region11: #{network_forward.1} parent=0 // pred_check_branch
    %15 = sbr.rel (0) target = $region13
  $region12: #{network_forward.1} parent=0 // pred_region
    _
  $region13: #{network_forward.1} parent=0 // pred_fallthru
    _
  // Predicated region
  $region14: #{network_forward.1} parent=0 // pred_check
    _
  $region15: #{network_forward.1} parent=0 // pred_check_branch
    %17 = sbr.rel (0) target = $region17
  $region16: #{network_forward.1} parent=0 // pred_region
    _
  $region17: #{network_forward.1} parent=0 // pred_fallthru
    _
  // Predicated region
  $region18: #{network_forward.1} parent=0 // pred_check
    _
  $region19: #{network_forward.1} parent=0 // pred_check_branch
    %19 = sbr.rel (0) target = $region21
  $region20: #{network_forward.1} parent=0 // pred_region
    _
  $region21: #{network_forward.1} parent=0 // pred_fallthru
    _
  %v20 = vld [vmem:[%s1] sm:$0xff]
  %v21 = vld [vmem:[%s1 + $0x8] sm:$0xff]
  %v22 = vld [vmem:[%s1 + $0x10] sm:$0xff]
  %v23 = vld [vmem:[%s1 + $0x18] sm:$0xff]
  %v24 = vld [vmem:[%s0] sm:$0xff]
  %v25 = vld [vmem:[%s4] sm:$0xff]
  %v26 = vld [vmem:[%s4 + $0x8] sm:$0xff]
  %v27 = vld [vmem:[%s4 + $0x10] sm:$0xff]
  %v28 = vld [vmem:[%s4 + $0x18] sm:$0xff]
  %30 = vset.pattern.permute.xlu0 0
  %31 = vperm.xlu0 %30, %v25
  %v32 = vpop.permute.xlu0 %31
  %35 = vset.pattern.permute.xlu0 0
  %36 = vperm.xlu0 %35, %v26
  %v37 = vpop.permute.xlu0 %36
  %40 = vset.pattern.permute.xlu0 0
  %41 = vperm.xlu0 %40, %v27
  %v42 = vpop.permute.xlu0 %41
  %45 = vset.pattern.permute.xlu0 0
  %46 = vperm.xlu0 %45, %v28
  %v47 = vpop.permute.xlu0 %46
  %vm49 = vcmask 64512
  %v51 = vsel %vm49, %v20, 0
  %v54 = vsel %vm49, %v21, 0
  %v57 = vsel %vm49, %v22, 0
  %v60 = vsel %vm49, %v23, 0
  %62 = vmatprep.subr.mxu0 0.0
  %63 = vmatpush1.msra.mxu0 0.0
  %64 = vmatprep.subr.mxu0 0.0
  %65 = vmatpush1.msra.mxu0 0.0
  %66 = vmatprep.subr.mxu0 0.0
  %67 = vmatpush1.msra.mxu0 0.0
  %68 = vmatprep.subr.mxu0 0.0
  %69 = vmatpush1.msra.mxu0 0.0
  %70 = vmatprep.subr.mxu0 0.0
  %71 = vmatpush1.msra.mxu0 0.0
  %72 = vmatprep.subr.mxu0 0.0
  %73 = vmatpush1.msra.mxu0 0.0
  %74 = vmatprep.subr.mxu0 0.0
  %75 = vmatpush1.msra.mxu0 0.0
  %76 = vmatprep.subr.mxu0 0.0
  %77 = vmatpush1.msra.mxu0 0.0
  %78 = vmatprep.subr.mxu0 0.0
  %79 = vmatpush1.msra.mxu0 0.0
  %80 = vmatprep.subr.mxu0 0.0
  %81 = vmatpush1.msra.mxu0 0.0
  %82 = vmatprep.subr.mxu0 0.0
  %83 = vmatpush1.msra.mxu0 0.0
  %84 = vmatprep.subr.mxu0 0.0
  %85 = vmatpush1.msra.mxu0 0.0
  %86 = vmatprep.subr.mxu0 0.0
  %87 = vmatpush1.msra.mxu0 0.0
  %88 = vmatprep.subr.mxu0 0.0
  %89 = vmatpush1.msra.mxu0 0.0
  %90 = vmatprep.subr.mxu0 0.0
  %91 = vmatpush1.msra.mxu0 0.0
  %92 = vmatprep.subr.mxu0 0.0
  %93 = vmatpush1.msra.mxu0 %v24
  %94 = vmatprep.subr.mxu0 0.0
  %95 = vmatpush2.msra.mxu0 0.0
  %96 = vmatprep.subr.mxu0 0.0
  %97 = vmatpush2.msra.mxu0 0.0
  %98 = vmatprep.subr.mxu0 0.0
  %99 = vmatpush2.msra.mxu0 0.0
  %100 = vmatprep.subr.mxu0 0.0
  %101 = vmatpush2.msra.mxu0 0.0
  %102 = vmatprep.subr.mxu0 0.0
  %103 = vmatpush2.msra.mxu0 0.0
  %104 = vmatprep.subr.mxu0 0.0
  %105 = vmatpush2.msra.mxu0 0.0
  %106 = vmatprep.subr.mxu0 0.0
  %107 = vmatpush2.msra.mxu0 0.0
  %108 = vmatprep.subr.mxu0 0.0
  %109 = vmatpush2.msra.mxu0 0.0
  %110 = vmatprep.subr.mxu0 0.0
  %111 = vmatpush2.msra.mxu0 0.0
  %112 = vmatprep.subr.mxu0 0.0
  %113 = vmatpush2.msra.mxu0 0.0
  %114 = vmatprep.subr.mxu0 0.0
  %115 = vmatpush2.msra.mxu0 0.0
  %116 = vmatprep.subr.mxu0 0.0
  %117 = vmatpush2.msra.mxu0 0.0
  %118 = vmatprep.subr.mxu0 0.0
  %119 = vmatpush2.msra.mxu0 0.0
  %120 = vmatprep.subr.mxu0 0.0
  %121 = vmatpush2.msra.mxu0 0.0
  %122 = vmatprep.subr.mxu0 0.0
  %123 = vmatpush2.msra.mxu0 0.0
  %124 = vmatprep.subr.mxu0 0.0
  %125 = vmatpush2.msra.mxu0 0.0
  %126 = vmatprep.mubr.f32.mxu0 0.0
  %127 = vmatmul.mubr.f32.gmra.mxu0 %v51
  %v128 = vpop.f32.mrf.mxu0
  %v129 = vadd.f32 %v32, %v128
  %v130 = vpop.f32.mrf.mxu0
  %131 = vmatprep.mubr.f32.mxu0 0.0
  %132 = vmatmul.mubr.f32.gmra.mxu0 %v54
  %v133 = vpop.f32.mrf.mxu0
  %v134 = vadd.f32 %v37, %v133
  %v135 = vpop.f32.mrf.mxu0
  %136 = vmatprep.mubr.f32.mxu0 0.0
  %137 = vmatmul.mubr.f32.gmra.mxu0 %v57
  %v138 = vpop.f32.mrf.mxu0
  %v139 = vadd.f32 %v42, %v138
  %v140 = vpop.f32.mrf.mxu0
  %141 = vmatprep.mubr.f32.mxu0 0.0
  %142 = vmatmul.mubr.f32.gmra.mxu0 %v60
  %v143 = vpop.f32.mrf.mxu0
  %v144 = vadd.f32 %v47, %v143
  %v145 = vpop.f32.mrf.mxu0
  %146 = vdwg.mxu0
  %v147 = vmax.f32 %v129, 0.0
  %v148 = vmax.f32 %v134, 0.0
  %v149 = vmax.f32 %v139, 0.0
  %v150 = vmax.f32 %v144, 0.0
  %v151 = vld [vmem:[%s2] sm:$0xff]
  %v152 = vld [vmem:[%s2 + $0x8] sm:$0xff]
  %v153 = vld [vmem:[%s2 + $0x10] sm:$0xff]
  %v154 = vld [vmem:[%s2 + $0x18] sm:$0xff]
  %s155 = scalar_lea.vmem %s4, 32
  %v156 = vld [vmem:[%s155] sm:$0xff]
  %v157 = vld [vmem:[%s155 + $0x8] sm:$0xff]
  %v158 = vld [vmem:[%s155 + $0x10] sm:$0xff]
  %v159 = vld [vmem:[%s155 + $0x18] sm:$0xff]
  %161 = vset.pattern.permute.xlu0 0
  %162 = vperm.xlu0 %161, %v156
  %v163 = vpop.permute.xlu0 %162
  %166 = vset.pattern.permute.xlu0 0
  %167 = vperm.xlu0 %166, %v157
  %v168 = vpop.permute.xlu0 %167
  %171 = vset.pattern.permute.xlu0 0
  %172 = vperm.xlu0 %171, %v158
  %v173 = vpop.permute.xlu0 %172
  %176 = vset.pattern.permute.xlu0 0
  %177 = vperm.xlu0 %176, %v159
  %v178 = vpop.permute.xlu0 %177
  %vm180 = vcmask 261120
  %v182 = vsel %vm180, %v151, 0
  %v185 = vsel %vm180, %v152, 0
  %v188 = vsel %vm180, %v153, 0
  %v191 = vsel %vm180, %v154, 0
  %193 = vmatprep.subr.mxu0 0.0
  %194 = vmatpush1.msra.mxu0 0.0
  %195 = vmatprep.subr.mxu0 0.0
  %196 = vmatpush1.msra.mxu0 0.0
  %197 = vmatprep.subr.mxu0 0.0
  %198 = vmatpush1.msra.mxu0 0.0
  %199 = vmatprep.subr.mxu0 0.0
  %200 = vmatpush1.msra.mxu0 0.0
  %201 = vmatprep.subr.mxu0 0.0
  %202 = vmatpush1.msra.mxu0 0.0
  %203 = vmatprep.subr.mxu0 0.0
  %204 = vmatpush1.msra.mxu0 0.0
  %205 = vmatprep.subr.mxu0 0.0
  %206 = vmatpush1.msra.mxu0 0.0
  %207 = vmatprep.subr.mxu0 0.0
  %208 = vmatpush1.msra.mxu0 0.0
  %209 = vmatprep.subr.mxu0 0.0
  %210 = vmatpush1.msra.mxu0 0.0
  %211 = vmatprep.subr.mxu0 0.0
  %212 = vmatpush1.msra.mxu0 0.0
  %213 = vmatprep.subr.mxu0 0.0
  %214 = vmatpush1.msra.mxu0 0.0
  %215 = vmatprep.subr.mxu0 0.0
  %216 = vmatpush1.msra.mxu0 0.0
  %217 = vmatprep.subr.mxu0 0.0
  %218 = vmatpush1.msra.mxu0 %v150
  %219 = vmatprep.subr.mxu0 0.0
  %220 = vmatpush1.msra.mxu0 %v149
  %221 = vmatprep.subr.mxu0 0.0
  %222 = vmatpush1.msra.mxu0 %v148
  %223 = vmatprep.subr.mxu0 0.0
  %224 = vmatpush1.msra.mxu0 %v147
  %225 = vmatprep.subr.mxu0 0.0
  %226 = vmatpush2.msra.mxu0 0.0
  %227 = vmatprep.subr.mxu0 0.0
  %228 = vmatpush2.msra.mxu0 0.0
  %229 = vmatprep.subr.mxu0 0.0
  %230 = vmatpush2.msra.mxu0 0.0
  %231 = vmatprep.subr.mxu0 0.0
  %232 = vmatpush2.msra.mxu0 0.0
  %233 = vmatprep.subr.mxu0 0.0
  %234 = vmatpush2.msra.mxu0 0.0
  %235 = vmatprep.subr.mxu0 0.0
  %236 = vmatpush2.msra.mxu0 0.0
  %237 = vmatprep.subr.mxu0 0.0
  %238 = vmatpush2.msra.mxu0 0.0
  %239 = vmatprep.subr.mxu0 0.0
  %240 = vmatpush2.msra.mxu0 0.0
  %241 = vmatprep.subr.mxu0 0.0
  %242 = vmatpush2.msra.mxu0 0.0
  %243 = vmatprep.subr.mxu0 0.0
  %244 = vmatpush2.msra.mxu0 0.0
  %245 = vmatprep.subr.mxu0 0.0
  %246 = vmatpush2.msra.mxu0 0.0
  %247 = vmatprep.subr.mxu0 0.0
  %248 = vmatpush2.msra.mxu0 0.0
  %249 = vmatprep.subr.mxu0 0.0
  %250 = vmatpush2.msra.mxu0 0.0
  %251 = vmatprep.subr.mxu0 0.0
  %252 = vmatpush2.msra.mxu0 0.0
  %253 = vmatprep.subr.mxu0 0.0
  %254 = vmatpush2.msra.mxu0 0.0
  %255 = vmatprep.subr.mxu0 0.0
  %256 = vmatpush2.msra.mxu0 0.0
  %257 = vmatprep.mubr.f32.mxu0 0.0
  %258 = vmatmul.mubr.f32.gmra.mxu0 %v182
  %v259 = vpop.f32.mrf.mxu0
  %v260 = vadd.f32 %v163, %v259
  %v261 = vpop.f32.mrf.mxu0
  %262 = vmatprep.mubr.f32.mxu0 0.0
  %263 = vmatmul.mubr.f32.gmra.mxu0 %v185
  %v264 = vpop.f32.mrf.mxu0
  %v265 = vadd.f32 %v168, %v264
  %v266 = vpop.f32.mrf.mxu0
  %267 = vmatprep.mubr.f32.mxu0 0.0
  %268 = vmatmul.mubr.f32.gmra.mxu0 %v188
  %v269 = vpop.f32.mrf.mxu0
  %v270 = vadd.f32 %v173, %v269
  %v271 = vpop.f32.mrf.mxu0
  %272 = vmatprep.mubr.f32.mxu0 0.0
  %273 = vmatmul.mubr.f32.gmra.mxu0 %v191
  %v274 = vpop.f32.mrf.mxu0
  %v275 = vadd.f32 %v178, %v274
  %v276 = vpop.f32.mrf.mxu0
  %277 = vdwg.mxu0
  %v278 = vmax.f32 %v260, 0.0
  %v279 = vmax.f32 %v265, 0.0
  %v280 = vmax.f32 %v270, 0.0
  %v281 = vmax.f32 %v275, 0.0
  %s282 = scalar_lea.vmem %s2, 32
  %v283 = vld [vmem:[%s282] sm:$0xff]
  %v284 = vld [vmem:[%s282 + $0x8] sm:$0xff]
  %v285 = vld [vmem:[%s282 + $0x10] sm:$0xff]
  %v286 = vld [vmem:[%s282 + $0x18] sm:$0xff]
  %s287 = scalar_lea.vmem %s4, 64
  %v288 = vld [vmem:[%s287] sm:$0xff]
  %v289 = vld [vmem:[%s287 + $0x8] sm:$0xff]
  %v290 = vld [vmem:[%s287 + $0x10] sm:$0xff]
  %v291 = vld [vmem:[%s287 + $0x18] sm:$0xff]
  %293 = vset.pattern.permute.xlu0 0
  %294 = vperm.xlu0 %293, %v288
  %v295 = vpop.permute.xlu0 %294
  %298 = vset.pattern.permute.xlu0 0
  %299 = vperm.xlu0 %298, %v289
  %v300 = vpop.permute.xlu0 %299
  %303 = vset.pattern.permute.xlu0 0
  %304 = vperm.xlu0 %303, %v290
  %v305 = vpop.permute.xlu0 %304
  %308 = vset.pattern.permute.xlu0 0
  %309 = vperm.xlu0 %308, %v291
  %v310 = vpop.permute.xlu0 %309
  %v313 = vsel %vm180, %v283, 0
  %v316 = vsel %vm180, %v284, 0
  %v319 = vsel %vm180, %v285, 0
  %v322 = vsel %vm180, %v286, 0
  %324 = vmatprep.subr.mxu0 0.0
  %325 = vmatpush1.msra.mxu0 0.0
  %326 = vmatprep.subr.mxu0 0.0
  %327 = vmatpush1.msra.mxu0 0.0
  %328 = vmatprep.subr.mxu0 0.0
  %329 = vmatpush1.msra.mxu0 0.0
  %330 = vmatprep.subr.mxu0 0.0
  %331 = vmatpush1.msra.mxu0 0.0
  %332 = vmatprep.subr.mxu0 0.0
  %333 = vmatpush1.msra.mxu0 0.0
  %334 = vmatprep.subr.mxu0 0.0
  %335 = vmatpush1.msra.mxu0 0.0
  %336 = vmatprep.subr.mxu0 0.0
  %337 = vmatpush1.msra.mxu0 0.0
  %338 = vmatprep.subr.mxu0 0.0
  %339 = vmatpush1.msra.mxu0 0.0
  %340 = vmatprep.subr.mxu0 0.0
  %341 = vmatpush1.msra.mxu0 0.0
  %342 = vmatprep.subr.mxu0 0.0
  %343 = vmatpush1.msra.mxu0 0.0
  %344 = vmatprep.subr.mxu0 0.0
  %345 = vmatpush1.msra.mxu0 0.0
  %346 = vmatprep.subr.mxu0 0.0
  %347 = vmatpush1.msra.mxu0 0.0
  %348 = vmatprep.subr.mxu0 0.0
  %349 = vmatpush1.msra.mxu0 %v281
  %350 = vmatprep.subr.mxu0 0.0
  %351 = vmatpush1.msra.mxu0 %v280
  %352 = vmatprep.subr.mxu0 0.0
  %353 = vmatpush1.msra.mxu0 %v279
  %354 = vmatprep.subr.mxu0 0.0
  %355 = vmatpush1.msra.mxu0 %v278
  %356 = vmatprep.subr.mxu0 0.0
  %357 = vmatpush2.msra.mxu0 0.0
  %358 = vmatprep.subr.mxu0 0.0
  %359 = vmatpush2.msra.mxu0 0.0
  %360 = vmatprep.subr.mxu0 0.0
  %361 = vmatpush2.msra.mxu0 0.0
  %362 = vmatprep.subr.mxu0 0.0
  %363 = vmatpush2.msra.mxu0 0.0
  %364 = vmatprep.subr.mxu0 0.0
  %365 = vmatpush2.msra.mxu0 0.0
  %366 = vmatprep.subr.mxu0 0.0
  %367 = vmatpush2.msra.mxu0 0.0
  %368 = vmatprep.subr.mxu0 0.0
  %369 = vmatpush2.msra.mxu0 0.0
  %370 = vmatprep.subr.mxu0 0.0
  %371 = vmatpush2.msra.mxu0 0.0
  %372 = vmatprep.subr.mxu0 0.0
  %373 = vmatpush2.msra.mxu0 0.0
  %374 = vmatprep.subr.mxu0 0.0
  %375 = vmatpush2.msra.mxu0 0.0
  %376 = vmatprep.subr.mxu0 0.0
  %377 = vmatpush2.msra.mxu0 0.0
  %378 = vmatprep.subr.mxu0 0.0
  %379 = vmatpush2.msra.mxu0 0.0
  %380 = vmatprep.subr.mxu0 0.0
  %381 = vmatpush2.msra.mxu0 0.0
  %382 = vmatprep.subr.mxu0 0.0
  %383 = vmatpush2.msra.mxu0 0.0
  %384 = vmatprep.subr.mxu0 0.0
  %385 = vmatpush2.msra.mxu0 0.0
  %386 = vmatprep.subr.mxu0 0.0
  %387 = vmatpush2.msra.mxu0 0.0
  %388 = vmatprep.mubr.f32.mxu0 0.0
  %389 = vmatmul.mubr.f32.gmra.mxu0 %v313
  %v390 = vpop.f32.mrf.mxu0
  %v391 = vadd.f32 %v295, %v390
  %v392 = vpop.f32.mrf.mxu0
  %393 = vmatprep.mubr.f32.mxu0 0.0
  %394 = vmatmul.mubr.f32.gmra.mxu0 %v316
  %v395 = vpop.f32.mrf.mxu0
  %v396 = vadd.f32 %v300, %v395
  %v397 = vpop.f32.mrf.mxu0
  %398 = vmatprep.mubr.f32.mxu0 0.0
  %399 = vmatmul.mubr.f32.gmra.mxu0 %v319
  %v400 = vpop.f32.mrf.mxu0
  %v401 = vadd.f32 %v305, %v400
  %v402 = vpop.f32.mrf.mxu0
  %403 = vmatprep.mubr.f32.mxu0 0.0
  %404 = vmatmul.mubr.f32.gmra.mxu0 %v322
  %v405 = vpop.f32.mrf.mxu0
  %v406 = vadd.f32 %v310, %v405
  %v407 = vpop.f32.mrf.mxu0
  %408 = vdwg.mxu0
  %v409 = vmax.f32 %v391, 0.0
  %v410 = vmax.f32 %v396, 0.0
  %v411 = vmax.f32 %v401, 0.0
  %v412 = vmax.f32 %v406, 0.0
  %v413 = vld [vmem:[%s3] sm:$0xff]
  %s414 = scalar_lea.vmem %s4, 96
  %v415 = vld [vmem:[%s414] sm:$0xff]
  %417 = vset.pattern.permute.xlu0 0
  %418 = vperm.xlu0 %417, %v415
  %v419 = vpop.permute.xlu0 %418
  %v422 = vsel %vm180, %v413, 0
  %424 = vmatprep.subr.mxu0 0.0
  %425 = vmatpush1.msra.mxu0 0.0
  %426 = vmatprep.subr.mxu0 0.0
  %427 = vmatpush1.msra.mxu0 0.0
  %428 = vmatprep.subr.mxu0 0.0
  %429 = vmatpush1.msra.mxu0 0.0
  %430 = vmatprep.subr.mxu0 0.0
  %431 = vmatpush1.msra.mxu0 0.0
  %432 = vmatprep.subr.mxu0 0.0
  %433 = vmatpush1.msra.mxu0 0.0
  %434 = vmatprep.subr.mxu0 0.0
  %435 = vmatpush1.msra.mxu0 0.0
  %436 = vmatprep.subr.mxu0 0.0
  %437 = vmatpush1.msra.mxu0 0.0
  %438 = vmatprep.subr.mxu0 0.0
  %439 = vmatpush1.msra.mxu0 0.0
  %440 = vmatprep.subr.mxu0 0.0
  %441 = vmatpush1.msra.mxu0 0.0
  %442 = vmatprep.subr.mxu0 0.0
  %443 = vmatpush1.msra.mxu0 0.0
  %444 = vmatprep.subr.mxu0 0.0
  %445 = vmatpush1.msra.mxu0 0.0
  %446 = vmatprep.subr.mxu0 0.0
  %447 = vmatpush1.msra.mxu0 0.0
  %448 = vmatprep.subr.mxu0 0.0
  %449 = vmatpush1.msra.mxu0 %v412
  %450 = vmatprep.subr.mxu0 0.0
  %451 = vmatpush1.msra.mxu0 %v411
  %452 = vmatprep.subr.mxu0 0.0
  %453 = vmatpush1.msra.mxu0 %v410
  %454 = vmatprep.subr.mxu0 0.0
  %455 = vmatpush1.msra.mxu0 %v409
  %456 = vmatprep.subr.mxu0 0.0
  %457 = vmatpush2.msra.mxu0 0.0
  %458 = vmatprep.subr.mxu0 0.0
  %459 = vmatpush2.msra.mxu0 0.0
  %460 = vmatprep.subr.mxu0 0.0
  %461 = vmatpush2.msra.mxu0 0.0
  %462 = vmatprep.subr.mxu0 0.0
  %463 = vmatpush2.msra.mxu0 0.0
  %464 = vmatprep.subr.mxu0 0.0
  %465 = vmatpush2.msra.mxu0 0.0
  %466 = vmatprep.subr.mxu0 0.0
  %467 = vmatpush2.msra.mxu0 0.0
  %468 = vmatprep.subr.mxu0 0.0
  %469 = vmatpush2.msra.mxu0 0.0
  %470 = vmatprep.subr.mxu0 0.0
  %471 = vmatpush2.msra.mxu0 0.0
  %472 = vmatprep.subr.mxu0 0.0
  %473 = vmatpush2.msra.mxu0 0.0
  %474 = vmatprep.subr.mxu0 0.0
  %475 = vmatpush2.msra.mxu0 0.0
  %476 = vmatprep.subr.mxu0 0.0
  %477 = vmatpush2.msra.mxu0 0.0
  %478 = vmatprep.subr.mxu0 0.0
  %479 = vmatpush2.msra.mxu0 0.0
  %480 = vmatprep.subr.mxu0 0.0
  %481 = vmatpush2.msra.mxu0 0.0
  %482 = vmatprep.subr.mxu0 0.0
  %483 = vmatpush2.msra.mxu0 0.0
  %484 = vmatprep.subr.mxu0 0.0
  %485 = vmatpush2.msra.mxu0 0.0
  %486 = vmatprep.subr.mxu0 0.0
  %487 = vmatpush2.msra.mxu0 0.0
  %488 = vmatprep.mubr.f32.mxu0 0.0
  %489 = vmatmul.mubr.f32.gmra.mxu0 %v422
  %v490 = vpop.f32.mrf.mxu0
  %v491 = vadd.f32 %v419, %v490
  %v492 = vpop.f32.mrf.mxu0
  %493 = vdwg.mxu0
  %494 = vst [vmem:[%s5] sm:$0xff] %v491
  // Predicated region
  $region22: #{network_forward.1} parent=0 // pred_check
    _
  $region23: #{network_forward.1} parent=0 // pred_check_branch
    %496 = sbr.rel (0) target = $region25
  $region24: #{network_forward.1} parent=0 // pred_region
    _
  $region25: #{network_forward.1} parent=0 // pred_fallthru
    _
  // Predicated region
  $region26: #{network_forward.1} parent=0 // pred_check
    _
  $region27: #{network_forward.1} parent=0 // pred_check_branch
    %498 = sbr.rel (0) target = $region29
  $region28: #{network_forward.1} parent=0 // pred_region
    _
  $region29: #{network_forward.1} parent=0 // pred_fallthru
    _

</llo_original>
